<compile_context>
chip_gen: v7x
topology: tpu7x:2x2x1
jax: 0.10.0
libtpu: 0.0.40
codegen_flags: <defaults>
</compile_context>

<pallas_src>
import functools
import math

import jax
import jax.numpy as jnp
from jax.experimental import pallas as pl
from jax.experimental.pallas import tpu as pltpu


# Column chunk (lanes) used inside the kernel so the f32 working copy of the
# tile stays chunk-bounded instead of emb_dim-bounded.
_COL_CHUNK = 512


def _rmsnorm_kernel(x_ref, w_ref, o_ref, *, inv_dim, eps):
    # x_ref: (tile_rows, emb_dim); w_ref: (1, emb_dim) f32; o_ref like x_ref.
    tr, emb = x_ref.shape
    chunk = min(_COL_CHUNK, emb)

    # Pass 1: sum of squares over the feature axis, f32 accumulate, done in
    # column chunks so at most ~one chunk-wide f32 slab is live at a time.
    ss = jnp.zeros((tr, 1), dtype=jnp.float32)
    for c0 in range(0, emb, chunk):
        c1 = min(c0 + chunk, emb)
        xf = x_ref[:, c0:c1].astype(jnp.float32)
        ss = ss + jnp.sum(xf * xf, axis=-1, keepdims=True)

    # mean(x^2) + eps, then rsqrt on the EUP (free slot in a mem-bound kernel).
    inv = jax.lax.rsqrt(ss * inv_dim + eps)           # (tr, 1) f32

    # Pass 2: re-cast per chunk (VPU has plenty of slack), scale by the f32
    # weight and the per-row inverse RMS, store in the output dtype.
    for c0 in range(0, emb, chunk):
        c1 = min(c0 + chunk, emb)
        xf = x_ref[:, c0:c1].astype(jnp.float32)
        o_ref[:, c0:c1] = (xf * inv * w_ref[:, c0:c1]).astype(o_ref.dtype)


def _round_up(n, m):
    return ((n + m - 1) // m) * m


def rmsnorm(x, weight, *, eps=1e-5, tile_rows=None):
    """RMSNorm over the last axis of x with per-feature weight.

    x: [..., emb_dim]; weight: [emb_dim]. Returns same shape/dtype as x.
    """
    orig_shape = x.shape
    emb_dim = orig_shape[-1]
    rows = int(math.prod(orig_shape[:-1]))

    x_bytes = jnp.dtype(x.dtype).itemsize
    # Sublane alignment: 8 rows for 32-bit, 16 for 16-bit, 32 for 8-bit dtypes.
    sublane = {4: 8, 2: 16, 1: 32}.get(x_bytes, 8)
    chunk = min(_COL_CHUNK, emb_dim)

    # No HBM-side padding / slicing: reshape only (free for contiguous arrays).
    x2d = x.reshape(rows, emb_dim)
    # Weight is f32 in the reference module; cast once in the wrapper.
    w2d = weight.astype(jnp.float32).reshape(1, emb_dim)

    # --- Row-tile sizing -----------------------------------------------------
    # ~36 MiB working-set budget: comfortable headroom under v7x's 64 MiB VMEM
    # per TC (and trivially inside v5e/v6e's 128 MiB). Per-row bytes:
    # double-buffered input + output tiles plus ~3 chunk-wide f32 temporaries.
    budget = 36 << 20
    bytes_per_row = emb_dim * 4 * x_bytes + 3 * 4 * chunk
    tr_max = max(sublane, (budget // bytes_per_row) // sublane * sublane)
    tr_max = min(tr_max, 1024)  # 512-1024 rows already reach the HBM roofline

    min_tr = _round_up(256, sublane)  # keep per-step (~0.35us) overhead small
    target_steps = 8                  # >= 3-4 steps per TC on v7x megacore

    if tile_rows is not None:
        tr = max(sublane, _round_up(int(tile_rows), sublane))
        tr = min(tr, tr_max)          # never exceed the VMEM budget
    else:
        tr = tr_max
        if rows > min_tr:
            # Cap tr so the grid has ~target_steps steps (DMA/compute overlap +
            # megacore balance) while keeping >= ~256-row tiles when possible.
            tr_steps = max(min_tr, (rows // target_steps) // sublane * sublane)
            tr = min(tr, tr_steps)

    # Never use a block taller than the (sublane-aligned) input; the partial
    # trailing block (if any) is handled by Pallas masked boundary stores.
    if rows <= sublane:
        tr = rows                     # single full-extent block (always legal)
    else:
        tr = min(tr, (rows // sublane) * sublane)

    grid = (pl.cdiv(rows, tr),)

    # Scoped-VMEM limit: actual working set + headroom, capped at 48 MiB so the
    # compiler keeps scratch/semaphore headroom under v7x's 64 MiB physical VMEM.
    tile_io = tr * emb_dim * x_bytes
    work_bytes = 2 * (tile_io + tile_io) + 3 * tr * chunk * 4 + 2 * emb_dim * 4
    vmem_limit = min(max(int(work_bytes * 1.25) + (2 << 20), 16 << 20), 48 << 20)

    out2d = pl.pallas_call(
        functools.partial(_rmsnorm_kernel, inv_dim=1.0 / emb_dim, eps=float(eps)),
        out_shape=jax.ShapeDtypeStruct((rows, emb_dim), x.dtype),
        grid_spec=pltpu.PrefetchScalarGridSpec(
            num_scalar_prefetch=0,
            grid=grid,
            in_specs=[
                pl.BlockSpec((tr, emb_dim), lambda i: (i, 0)),
                # Constant index map: weight tile is fetched once and reused.
                pl.BlockSpec((1, emb_dim), lambda i: (0, 0)),
            ],
            out_specs=pl.BlockSpec((tr, emb_dim), lambda i: (i, 0)),
        ),
        compiler_params=pltpu.CompilerParams(
            dimension_semantics=("parallel",),
            vmem_limit_bytes=vmem_limit,
        ),
    )(x2d, w2d)

    return out2d.reshape(orig_shape)


def rmsnorm_ref(x, weight, eps=1e-5):
    xf = x.astype(jnp.float32)
    means = jnp.mean(xf * xf, axis=-1, keepdims=True)
    x_normed = xf * jax.lax.rsqrt(means + eps)
    return (x_normed * weight.astype(jnp.float32)).astype(x.dtype)


if __name__ == "__main__":
    key = jax.random.PRNGKey(0)
    batch, seq, emb_dim = 2, 8, 32

    x = jax.random.normal(key, (batch, seq, emb_dim), dtype=jnp.float32)
    # nn.Parameter(torch.ones(emb_dim)).float() -> deterministic ones init
    weight = jnp.ones((emb_dim,), dtype=jnp.float32)

    out = rmsnorm(x, weight, eps=1e-5)
    out = jax.block_until_ready(out)

    ref = rmsnorm_ref(x, weight, eps=1e-5)
    assert out.shape == x.shape and out.dtype == x.dtype
    assert jnp.allclose(out, ref, atol=1e-5, rtol=1e-5)

    print("KERNEL_OK")
</pallas_src>

<mosaic_0001>
module attributes {stable_mosaic.version = 11 : i64} {
  func.func @_rmsnorm_kernel(%arg0: i32, %arg1: memref<16x32xf32, #tpu.memory_space<vmem>>, %arg2: memref<1x32xf32, #tpu.memory_space<vmem>>, %arg3: memref<16x32xf32, #tpu.memory_space<vmem>>) attributes {dimension_semantics = [#tpu.dimension_semantics<parallel>], iteration_bounds = array<i64: 1>, scalar_prefetch = 0 : i64, scratch_operands = 0 : i64, tpu.core_type = #tpu.core_type<tc>, window_params = [{transform_indices = @transform_0, window_bounds = array<i64: 16, 32>}, {pipeline_mode = #tpu.pipeline_mode<synchronous>, transform_indices = @transform_1, window_bounds = array<i64: 1, 32>}, {transform_indices = @transform_2, window_bounds = array<i64: 16, 32>}]} {
    %cst = arith.constant 0.000000e+00 : f32
    %0 = vector.broadcast %cst : f32 to vector<16x1xf32>
    %c0 = arith.constant 0 : index
    %c0_0 = arith.constant 0 : index
    %1 = vector.load %arg1[%c0, %c0_0] : memref<16x32xf32, #tpu.memory_space<vmem>>, vector<16x32xf32>
    %2 = arith.mulf %1, %1 : vector<16x32xf32>
    %cst_1 = arith.constant dense<0.000000e+00> : vector<16xf32>
    %3 = vector.multi_reduction <add>, %2, %cst_1 [1] : vector<16x32xf32> to vector<16xf32>
    %4 = vector.shape_cast %3 : vector<16xf32> to vector<16x1xf32>
    %5 = arith.addf %0, %4 : vector<16x1xf32>
    %cst_2 = arith.constant 3.125000e-02 : f32
    %6 = vector.broadcast %cst_2 : f32 to vector<16x1xf32>
    %7 = arith.mulf %5, %6 : vector<16x1xf32>
    %cst_3 = arith.constant 9.99999974E-6 : f32
    %8 = vector.broadcast %cst_3 : f32 to vector<16x1xf32>
    %9 = arith.addf %7, %8 : vector<16x1xf32>
    %10 = math.rsqrt %9 : vector<16x1xf32>
    %c0_4 = arith.constant 0 : index
    %c0_5 = arith.constant 0 : index
    %11 = vector.load %arg1[%c0_4, %c0_5] : memref<16x32xf32, #tpu.memory_space<vmem>>, vector<16x32xf32>
    %12 = vector.broadcast %10 : vector<16x1xf32> to vector<16x32xf32>
    %13 = arith.mulf %11, %12 : vector<16x32xf32>
    %c0_6 = arith.constant 0 : index
    %c0_7 = arith.constant 0 : index
    %14 = vector.load %arg2[%c0_6, %c0_7] : memref<1x32xf32, #tpu.memory_space<vmem>>, vector<1x32xf32>
    %15 = vector.broadcast %14 : vector<1x32xf32> to vector<16x32xf32>
    %16 = arith.mulf %13, %15 : vector<16x32xf32>
    %c0_8 = arith.constant 0 : index
    %c0_9 = arith.constant 0 : index
    %17 = vector.load %arg3[%c0_8, %c0_9] : memref<16x32xf32, #tpu.memory_space<vmem>>, vector<16x32xf32>
    tpu.vector_store %arg3[%c0_8, %c0_9], %16 {strides = array<i32>} : memref<16x32xf32, #tpu.memory_space<vmem>>, vector<16x32xf32>,
    return
  }
  func.func @transform_0(%arg0: i32) -> (i32, i32) {
    %c0_i32 = arith.constant 0 : i32
    %c0_i32_0 = arith.constant 0 : i32
    return %arg0, %c0_i32 : i32, i32
  }
  func.func @transform_1(%arg0: i32) -> (i32, i32) {
    %c0_i32 = arith.constant 0 : i32
    %c0_i32_0 = arith.constant 0 : i32
    %c0_i32_1 = arith.constant 0 : i32
    return %c0_i32, %c0_i32_0 : i32, i32
  }
  func.func @transform_2(%arg0: i32) -> (i32, i32) {
    %c0_i32 = arith.constant 0 : i32
    %c0_i32_0 = arith.constant 0 : i32
    return %arg0, %c0_i32 : i32, i32
  }
}

</mosaic_0001>

<llo_original>
// kernel: tpu_custom_call.1
$region0: #{tpu_custom_call.1}
  #allocation0 [shape = 'u32[]', space=smem, size = 0x4, offset = 0x4, fixed_abs, tag = 'smem constant byte address 0x4 - core index']
  #allocation1 [shape = 'u32[144,128]{1,0:T(1,128)}', space=vmem, size = 0x12000, scoped, tag = 'internal scratch']
  %s0 = inlined_call_operand.hbm [shape: f32[16,32], index: 0, kind: input, shape index: {}]
  %s1 = inlined_call_operand.vmem [shape: f32[1,32], index: 1, kind: input, shape index: {}]
  %s2 = inlined_call_operand.hbm [shape: f32[16,32], index: 2, kind: output, shape index: {}]
  %s3 = sld [smem:[#allocation0]]
  $region22: #{tpu_custom_call.1} parent=0
    _
  %s5 = ssub.s32 1, %s3
  %s6 = scalar_select 0, %s5, %s3
  $region1: #{tpu_custom_call.1} parent=0
    #allocation2 [shape = 'u8[8192]{0}', space=vmem, size = 0x2000, scoped, tag = 'input window, operand 0, single buffered']
    #allocation3 [shape = 's32[1]{0}', space=sflag, size = 0x4, scoped, tag = 'scoped memory for tpu_custom_call.1']
    #allocation4 [shape = 's32[1]{0}', space=sflag, size = 0x4, scoped, tag = 'scoped memory for tpu_custom_call.1']
    #allocation5 [shape = 'u8[8192]{0}', space=vmem, size = 0x2000, scoped, tag = 'output window, operand 0, single buffered']
    %7 = vsyncpa [#allocation3], 0
    %8 = vsyncpa [#allocation4], 0
    // Predicated region
    $region2: #{tpu_custom_call.1} parent=1 // pred_check
      _
    $region3: #{tpu_custom_call.1} parent=1 // pred_check_branch
      %10 = sbr.rel (0) target = $region5
    $region4: #{tpu_custom_call.1} parent=1 // pred_region
      %s12 = ssub.s32 256, 256
      %13 = vsyncadd [#allocation3], %s12
      %s14 = sshll.u32 [#allocation2], 4
      %s15 = int_to_ptr.vmem [resolvable:$true] %s14
      %20 = dma.hbm_to_vmem [thread:$0]  %s0, 256, %s15, [#allocation3], 128, 128, 8
    $region5: #{tpu_custom_call.1} parent=1 // pred_fallthru
      _
    // Predicated region
    $region6: #{tpu_custom_call.1} parent=1 // pred_check
      _
    $region7: #{tpu_custom_call.1} parent=1 // pred_check_branch
      %22 = sbr.rel (0) target = $region9
    $region8: #{tpu_custom_call.1} parent=1 // pred_region
      _
    $region9: #{tpu_custom_call.1} parent=1 // pred_fallthru
      _
    // Predicated region
    $region10: #{tpu_custom_call.1} parent=1 // pred_check
      _
    $region11: #{tpu_custom_call.1} parent=1 // pred_check_branch
      %24 = sbr.rel (0) target = $region13
    $region12: #{tpu_custom_call.1} parent=1 // pred_region
      %25 = dma.done [#allocation3], 256
    $region13: #{tpu_custom_call.1} parent=1 // pred_fallthru
      _
    %v26 = vld [vmem:[#allocation2] sm:$0xff]
    %v27 = vld [vmem:[#allocation2 + $0x8] sm:$0xff]
    %v28 = vmul.f32 %v26, %v26
    %v29 = vmul.f32 %v27, %v27
    %vm30 = vcmask 261120
    %v31 = vsel %vm30, %v28, 0.0
    %32 = vadd.xlane.f32.xlu0 %v31
    %v33 = vpop.xlane.xlu0 %32
    %v34 = vsel %vm30, %v29, 0.0
    %35 = vadd.xlane.f32.xlu0 %v34
    %v36 = vpop.xlane.xlu0 %35
    %v37 = vadd.f32 %v33, 0.0
    %v38 = vadd.f32 %v36, 0.0
    %v39 = vmul.f32 %v37, 0.03125
    %v40 = vmul.f32 %v38, 0.03125
    %v41 = vadd.f32 %v39, 1e-05
    %v42 = vadd.f32 %v40, 1e-05
    %v43 = vrsqrt.pop %v41
    %v44 = vrsqrt.pop %v42
    %v45 = vmul.f32 %v26, %v43
    %v46 = vmul.f32 %v27, %v44
    %v47 = vld [vmem:[%s1] sm:$0x1]
    %v49 = vlaneseq
    %v50 = vshrl.u32 %v49, 7
    %v51 = vsub.s32 0, %v50
    %v52 = vrot.slane %v47, %v51
    %v54 = vmul.f32 %v45, %v52
    %v55 = vmul.f32 %v46, %v52
    %56 = vst.msk [vmem:[#allocation5] sm:$0xff] %vm30, %v54
    %57 = vst.msk [vmem:[#allocation5 + $0x8] sm:$0xff] %vm30, %v55
    // Predicated region
    $region14: #{tpu_custom_call.1} parent=1 // pred_check
      _
    $region15: #{tpu_custom_call.1} parent=1 // pred_check_branch
      %59 = sbr.rel (0) target = $region17
    $region16: #{tpu_custom_call.1} parent=1 // pred_region
      %s61 = ssub.s32 256, 256
      %62 = vsyncadd [#allocation4], %s61
      %s63 = sshll.u32 [#allocation5], 4
      %s64 = int_to_ptr.vmem [resolvable:$true] %s63
      %69 = dma.vmem_to_hbm [thread:$0]  %s64, 256, %s2, [#allocation4], 128, 128, 8
    $region17: #{tpu_custom_call.1} parent=1 // pred_fallthru
      _
    // Predicated region
    $region18: #{tpu_custom_call.1} parent=1 // pred_check
      _
    $region19: #{tpu_custom_call.1} parent=1 // pred_check_branch
      %71 = sbr.rel (0) target = $region21
    $region20: #{tpu_custom_call.1} parent=1 // pred_region
      %72 = dma.done [#allocation4], 256
    $region21: #{tpu_custom_call.1} parent=1 // pred_fallthru
      _
    %73 = vsyncpa [#allocation3], 1
    %74 = vsyncpa [#allocation4], 1

</llo_original>
